<compile_context>
chip_gen: v5e
topology: v5e:2x2
jax: 0.10.0
libtpu: 0.0.40
codegen_flags: <defaults>
</compile_context>

<pallas_src>
import functools

import jax
import jax.numpy as jnp
from jax import lax
from jax.experimental import pallas as pl
from jax.experimental.pallas import tpu as pltpu


def conv_block_kernel(x_ref, w_ref, b_ref, o_ref, slab_ref, *,
                      H_tile, W, C_in_p, K, pad, use_act, n_row_tiles):
    # x_ref    : (1, C_in_p, (H + 2*(pad+1)) * W)  flat, H-padded input (bf16), whole image
    # w_ref    : (C_out, K*K*C_in_p)               fused conv weights (bf16)
    # b_ref    : (C_out, 1)                        bias (f32)
    # o_ref    : (1, C_out, H_tile*W)              NCHW-flat output row-tile (lane-dense)
    # slab_ref : (K*K*C_in_p, H_tile*W) bf16       im2col slab scratch
    HW_t = H_tile * W

    # Base lane offset of this row tile into the flat padded image.
    if n_row_tiles == 1:
        base = 0
    else:
        base = pl.program_id(1) * HW_t
        if HW_t % 128 == 0:
            base = pl.multiple_of(base, 128)

    # Hoisted W-boundary masks: built (and broadcast) once, reused by all K taps that
    # share the same column shift d = kw - pad.
    col = lax.broadcasted_iota(jnp.int32, (1, HW_t), 1) % W
    masks = {}
    for d in range(-pad, pad + 1):
        if d == 0:
            continue
        m = jnp.logical_and(col + d >= 0, col + d < W)
        masks[d] = jnp.broadcast_to(m, (C_in_p, HW_t))
    zero = jnp.zeros((), dtype=slab_ref.dtype)

    # Build the im2col slab in bf16: every tap is a pure lane-offset slice of the flat
    # image; the wrap-around columns introduced by the flat (no W-padding) layout are
    # zeroed with the hoisted masks.
    # TODO(synk): at production channel counts (C_in ~ 64), split this into kh-group
    # sub-slabs and K-chunk the contraction so slab build overlaps the MXU pushes.
    for kh in range(K):
        for kw in range(K):
            t = kh * K + kw
            off = (kh + 1) * W + (kw - pad)                      # static lane offset
            patch = x_ref[0, :, pl.ds(base + off, HW_t)]         # (C_in_p, HW_t) bf16
            d = kw - pad
            if d != 0:
                patch = jnp.where(masks[d], patch, zero)
            slab_ref[t * C_in_p:(t + 1) * C_in_p, :] = patch

    # Single fused MXU contraction over all taps/channels (bf16 operands, f32 accum).
    acc = jnp.dot(w_ref[...], slab_ref[...], preferred_element_type=jnp.float32)
    y = acc + b_ref[...]                                         # (C_out, 1) broadcast
    if use_act:
        y = jnp.where(y > 0, y, 0.2 * y)                         # LeakyReLU(0.2)
    o_ref[0] = y.astype(o_ref.dtype)


def _pick_row_tile(H, W, slab_row_bytes, budget_bytes):
    """Largest H_tile (divisor of H) whose slab fits the budget; row tiles smaller than
    the whole image must keep H_tile*W a multiple of 128 (BlockSpec lane constraint)."""
    if H * slab_row_bytes <= budget_bytes:
        return H
    cands = [ht for ht in range(1, H)
             if H % ht == 0 and (ht * W) % 128 == 0 and ht * slab_row_bytes <= budget_bytes]
    return max(cands) if cands else H


def conv_block_forward(x_nchw, weight_oihw, bias, *, use_act=True, stride=1, padding=1,
                       compute_dtype=jnp.bfloat16, out_dtype=None,
                       slab_budget_bytes=8 * 2**20):
    """ConvBlock forward. x_nchw: (N, C_in, H, W) -> (N, C_out, H, W)."""
    N, C_in, H, W = x_nchw.shape
    C_out, C_in_w, K, K2 = weight_oihw.shape
    assert C_in_w == C_in and K == K2
    assert stride == 1, "Pallas ConvBlock kernel implements stride=1 only."
    assert K % 2 == 1 and padding == (K - 1) // 2, (
        "Pallas ConvBlock kernel requires padding == (K - 1) // 2.")

    pad = padding
    ph = pad + 1                       # H halo so every tap slice stays in-bounds
    HW = H * W
    itemsize = jnp.dtype(compute_dtype).itemsize
    # Pad input channels to a sublane-tile multiple (16 for bf16) so each tap's slab
    # store is a full aligned tile; padded weight rows are zero so the math is exact.
    sub = 8 * max(1, 4 // itemsize)
    C_in_p = max(sub, ((C_in + sub - 1) // sub) * sub)
    KKC_p = K * K * C_in_p
    Lp = (H + 2 * ph) * W
    out_dtype = x_nchw.dtype if out_dtype is None else out_dtype

    # Row tiling: output/slab are H_tile rows; the padded image block stays constant
    # along the row axis (resident in VMEM, fetched once per batch element).
    H_tile = _pick_row_tile(H, W, KKC_p * W * itemsize, slab_budget_bytes)
    n_row_tiles = H // H_tile
    HW_t = H_tile * W

    # bf16 input, channel pad + H-only zero pad, spatial flattened onto the lane axis.
    # TODO(synk): avoid this wrapper-side pad/cast pass over the activations by keeping
    # x in HBM (memory_space=pl.ANY) and DMAing each row tile + 1-row halo manually.
    x_flat = jnp.pad(x_nchw.astype(compute_dtype),
                     ((0, 0), (0, C_in_p - C_in), (ph, ph), (0, 0))).reshape(N, C_in_p, Lp)
    # OIHW -> (C_out, (kh*K + kw)*C_in_p + cin): one fused weight matrix (bf16).
    w_p = jnp.pad(weight_oihw, ((0, 0), (0, C_in_p - C_in), (0, 0), (0, 0)))
    w2 = jnp.transpose(w_p, (0, 2, 3, 1)).reshape(C_out, KKC_p).astype(compute_dtype)
    b2 = bias.reshape(C_out, 1).astype(jnp.float32)

    kernel = functools.partial(
        conv_block_kernel, H_tile=H_tile, W=W, C_in_p=C_in_p, K=K, pad=pad,
        use_act=use_act, n_row_tiles=n_row_tiles)

    # Scoped-VMEM budget: double-buffered input/weight/output blocks + bf16 slab.
    out_item = jnp.dtype(out_dtype).itemsize
    per_step = (2 * C_in_p * Lp * itemsize + 2 * C_out * HW_t * out_item
                + 2 * C_out * KKC_p * itemsize + 2 * C_out * 4
                + KKC_p * HW_t * itemsize)
    vmem_limit = int(min(48 * 2**20, max(32 * 2**20, 2 * per_step)))

    # TODO(synk): for tiny feature maps, pack several batch images per grid step
    # ((KKC_p, Nb*HW) RHS) to amortize per-step overhead and MXU weight pushes.
    out_flat = pl.pallas_call(
        kernel,
        out_shape=jax.ShapeDtypeStruct((N, C_out, HW), out_dtype),
        grid_spec=pltpu.PrefetchScalarGridSpec(
            num_scalar_prefetch=0,
            grid=(N, n_row_tiles),
            in_specs=[
                pl.BlockSpec((1, C_in_p, Lp), lambda n, r: (n, 0, 0)),   # resident image
                pl.BlockSpec((C_out, KKC_p), lambda n, r: (0, 0)),
                pl.BlockSpec((C_out, 1), lambda n, r: (0, 0)),
            ],
            out_specs=pl.BlockSpec((1, C_out, HW_t), lambda n, r: (n, 0, r)),
            scratch_shapes=[pltpu.VMEM((KKC_p, HW_t), compute_dtype)],  # bf16 slab
        ),
        compiler_params=pltpu.CompilerParams(
            dimension_semantics=("parallel", "parallel"),   # batch x row-tiles -> both TCs
            vmem_limit_bytes=vmem_limit,
        ),
    )(x_flat, w2, b2)

    # NCHW-flat -> NCHW: pure metadata reshape, no transpose pass over HBM.
    return out_flat.reshape(N, C_out, H, W)


if __name__ == "__main__":
    # ConvBlock(in_channels=4, out_channels=8, use_act=True,
    #           kernel_size=3, stride=1, padding=1)
    N, C_in, H, W = 2, 4, 16, 16
    C_out, K = 8, 3

    key = jax.random.PRNGKey(0)
    kx, kw, kb = jax.random.split(key, 3)

    x = jax.random.normal(kx, (N, C_in, H, W), dtype=jnp.float32)
    # Deterministic init roughly matching PyTorch's default uniform fan-in scaling.
    fan_in = C_in * K * K
    bound = 1.0 / (fan_in ** 0.5)
    weight = jax.random.uniform(kw, (C_out, C_in, K, K), jnp.float32, -bound, bound)
    bias = jax.random.uniform(kb, (C_out,), jnp.float32, -bound, bound)

    out = conv_block_forward(x, weight, bias, use_act=True, padding=1)
    out = jax.block_until_ready(out)
    assert out.shape == (N, C_out, H, W)

    # Reference with the same bf16 rounding of x / w as the kernel, f32 conv.
    xr = x.astype(jnp.bfloat16).astype(jnp.float32)
    wr = weight.astype(jnp.bfloat16).astype(jnp.float32)
    ref = lax.conv_general_dilated(
        xr, wr, window_strides=(1, 1), padding=((1, 1), (1, 1)),
        dimension_numbers=("NCHW", "OIHW", "NCHW"),
        precision=lax.Precision.HIGHEST,
    ) + bias.reshape(1, C_out, 1, 1)
    ref = jnp.where(ref > 0, ref, 0.2 * ref)
    err = float(jnp.max(jnp.abs(out - ref)))
    assert err < 2e-3, f"max abs err {err}"

    print("KERNEL_OK")
</pallas_src>

<mosaic_0001>
module attributes {stable_mosaic.version = 11 : i64} {
  func.func @conv_block_kernel(%arg0: i32, %arg1: i32, %arg2: memref<1x16x320xbf16, #tpu.memory_space<vmem>>, %arg3: memref<8x144xbf16, #tpu.memory_space<vmem>>, %arg4: memref<8x1xf32, #tpu.memory_space<vmem>>, %arg5: memref<1x8x256xf32, #tpu.memory_space<vmem>>, %arg6: memref<144x256xbf16, #tpu.memory_space<vmem>>) attributes {dimension_semantics = [#tpu.dimension_semantics<parallel>, #tpu.dimension_semantics<parallel>], iteration_bounds = array<i64: 2, 1>, scalar_prefetch = 0 : i64, scratch_operands = 1 : i64, tpu.core_type = #tpu.core_type<tc>, window_params = [{transform_indices = @transform_0, window_bounds = array<i64: 1, 16, 320>}, {pipeline_mode = #tpu.pipeline_mode<synchronous>, transform_indices = @transform_1, window_bounds = array<i64: 8, 144>}, {pipeline_mode = #tpu.pipeline_mode<synchronous>, transform_indices = @transform_2, window_bounds = array<i64: 8, 1>}, {transform_indices = @transform_3, window_bounds = array<i64: 1, 8, 256>}]} {
    %0 = tpu.iota {dimensions = array<i32: 1>} : vector<1x256xi32>
    %c16_i32 = arith.constant 16 : i32
    %c0_i32 = arith.constant 0 : i32
    %1 = arith.cmpi eq, %c16_i32, %c0_i32 : i32
    %c1_i32 = arith.constant 1 : i32
    %2 = arith.select %1, %c1_i32, %c16_i32 : i32
    %3 = vector.broadcast %2 : i32 to vector<1x256xi32>
    %4 = arith.remsi %0, %3 : vector<1x256xi32>
    %c0_i32_0 = arith.constant 0 : i32
    %5 = vector.broadcast %c0_i32_0 : i32 to vector<1x256xi32>
    %6 = arith.cmpi ne, %4, %5 : vector<1x256xi32>
    %c0_i32_1 = arith.constant 0 : i32
    %7 = vector.broadcast %c0_i32_1 : i32 to vector<1x256xi32>
    %8 = arith.cmpi slt, %4, %7 : vector<1x256xi32>
    %c0_i32_2 = arith.constant 0 : i32
    %9 = arith.cmpi slt, %2, %c0_i32_2 : i32
    %10 = vector.broadcast %9 : i1 to vector<1x256xi1>
    %11 = vector.broadcast %10 : vector<1x256xi1> to vector<1x256xi1>
    %12 = arith.xori %8, %11 : vector<1x256xi1>
    %13 = arith.andi %12, %6 : vector<1x256xi1>
    %14 = vector.broadcast %2 : i32 to vector<1x256xi32>
    %15 = arith.addi %4, %14 : vector<1x256xi32>
    %16 = arith.select %13, %15, %4 : vector<1x256xi1>, vector<1x256xi32>
    %c-1_i32 = arith.constant -1 : i32
    %17 = vector.broadcast %c-1_i32 : i32 to vector<1x256xi32>
    %18 = arith.addi %16, %17 : vector<1x256xi32>
    %c0_i32_3 = arith.constant 0 : i32
    %19 = vector.broadcast %c0_i32_3 : i32 to vector<1x256xi32>
    %20 = arith.cmpi sge, %18, %19 : vector<1x256xi32>
    %c-1_i32_4 = arith.constant -1 : i32
    %21 = vector.broadcast %c-1_i32_4 : i32 to vector<1x256xi32>
    %22 = arith.addi %16, %21 : vector<1x256xi32>
    %c16_i32_5 = arith.constant 16 : i32
    %23 = vector.broadcast %c16_i32_5 : i32 to vector<1x256xi32>
    %24 = arith.cmpi slt, %22, %23 : vector<1x256xi32>
    %25 = arith.andi %20, %24 : vector<1x256xi1>
    %26 = vector.shape_cast %25 : vector<1x256xi1> to vector<1x256xi1>
    %27 = vector.broadcast %26 : vector<1x256xi1> to vector<16x256xi1>
    %c1_i32_6 = arith.constant 1 : i32
    %28 = vector.broadcast %c1_i32_6 : i32 to vector<1x256xi32>
    %29 = arith.addi %16, %28 : vector<1x256xi32>
    %c0_i32_7 = arith.constant 0 : i32
    %30 = vector.broadcast %c0_i32_7 : i32 to vector<1x256xi32>
    %31 = arith.cmpi sge, %29, %30 : vector<1x256xi32>
    %c1_i32_8 = arith.constant 1 : i32
    %32 = vector.broadcast %c1_i32_8 : i32 to vector<1x256xi32>
    %33 = arith.addi %16, %32 : vector<1x256xi32>
    %c16_i32_9 = arith.constant 16 : i32
    %34 = vector.broadcast %c16_i32_9 : i32 to vector<1x256xi32>
    %35 = arith.cmpi slt, %33, %34 : vector<1x256xi32>
    %36 = arith.andi %31, %35 : vector<1x256xi1>
    %37 = vector.shape_cast %36 : vector<1x256xi1> to vector<1x256xi1>
    %38 = vector.broadcast %37 : vector<1x256xi1> to vector<16x256xi1>
    %c0 = arith.constant 0 : index
    %c0_10 = arith.constant 0 : index
    %c15 = arith.constant 15 : index
    %39 = vector.load %arg2[%c0, %c0_10, %c15] : memref<1x16x320xbf16, #tpu.memory_space<vmem>>, vector<1x16x256xbf16>
    %40 = vector.shape_cast %39 : vector<1x16x256xbf16> to vector<16x256xbf16>
    %cst = arith.constant 0.000000e+00 : bf16
    %41 = vector.broadcast %cst : bf16 to vector<16x256xbf16>
    %42 = arith.select %27, %40, %41 : vector<16x256xi1>, vector<16x256xbf16>
    %c0_11 = arith.constant 0 : index
    %c0_12 = arith.constant 0 : index
    %43 = vector.load %arg6[%c0_11, %c0_12] : memref<144x256xbf16, #tpu.memory_space<vmem>>, vector<16x256xbf16>
    tpu.vector_store %arg6[%c0_11, %c0_12], %42 {strides = array<i32>} : memref<144x256xbf16, #tpu.memory_space<vmem>>, vector<16x256xbf16>,
    %c0_13 = arith.constant 0 : index
    %c0_14 = arith.constant 0 : index
    %c16 = arith.constant 16 : index
    %44 = vector.load %arg2[%c0_13, %c0_14, %c16] : memref<1x16x320xbf16, #tpu.memory_space<vmem>>, vector<1x16x256xbf16>
    %45 = vector.shape_cast %44 : vector<1x16x256xbf16> to vector<16x256xbf16>
    %c16_15 = arith.constant 16 : index
    %c0_16 = arith.constant 0 : index
    %46 = vector.load %arg6[%c16_15, %c0_16] : memref<144x256xbf16, #tpu.memory_space<vmem>>, vector<16x256xbf16>
    tpu.vector_store %arg6[%c16_15, %c0_16], %45 {strides = array<i32>} : memref<144x256xbf16, #tpu.memory_space<vmem>>, vector<16x256xbf16>,
    %c0_17 = arith.constant 0 : index
    %c0_18 = arith.constant 0 : index
    %c17 = arith.constant 17 : index
    %47 = vector.load %arg2[%c0_17, %c0_18, %c17] : memref<1x16x320xbf16, #tpu.memory_space<vmem>>, vector<1x16x256xbf16>
    %48 = vector.shape_cast %47 : vector<1x16x256xbf16> to vector<16x256xbf16>
    %cst_19 = arith.constant 0.000000e+00 : bf16
    %49 = vector.broadcast %cst_19 : bf16 to vector<16x256xbf16>
    %50 = arith.select %38, %48, %49 : vector<16x256xi1>, vector<16x256xbf16>
    %c32 = arith.constant 32 : index
    %c0_20 = arith.constant 0 : index
    %51 = vector.load %arg6[%c32, %c0_20] : memref<144x256xbf16, #tpu.memory_space<vmem>>, vector<16x256xbf16>
    tpu.vector_store %arg6[%c32, %c0_20], %50 {strides = array<i32>} : memref<144x256xbf16, #tpu.memory_space<vmem>>, vector<16x256xbf16>,
    %c0_21 = arith.constant 0 : index
    %c0_22 = arith.constant 0 : index
    %c31 = arith.constant 31 : index
    %52 = vector.load %arg2[%c0_21, %c0_22, %c31] : memref<1x16x320xbf16, #tpu.memory_space<vmem>>, vector<1x16x256xbf16>
    %53 = vector.shape_cast %52 : vector<1x16x256xbf16> to vector<16x256xbf16>
    %cst_23 = arith.constant 0.000000e+00 : bf16
    %54 = vector.broadcast %cst_23 : bf16 to vector<16x256xbf16>
    %55 = arith.select %27, %53, %54 : vector<16x256xi1>, vector<16x256xbf16>
    %c48 = arith.constant 48 : index
    %c0_24 = arith.constant 0 : index
    %56 = vector.load %arg6[%c48, %c0_24] : memref<144x256xbf16, #tpu.memory_space<vmem>>, vector<16x256xbf16>
    tpu.vector_store %arg6[%c48, %c0_24], %55 {strides = array<i32>} : memref<144x256xbf16, #tpu.memory_space<vmem>>, vector<16x256xbf16>,
    %c0_25 = arith.constant 0 : index
    %c0_26 = arith.constant 0 : index
    %c32_27 = arith.constant 32 : index
    %57 = vector.load %arg2[%c0_25, %c0_26, %c32_27] : memref<1x16x320xbf16, #tpu.memory_space<vmem>>, vector<1x16x256xbf16>
    %58 = vector.shape_cast %57 : vector<1x16x256xbf16> to vector<16x256xbf16>
    %c64 = arith.constant 64 : index
    %c0_28 = arith.constant 0 : index
    %59 = vector.load %arg6[%c64, %c0_28] : memref<144x256xbf16, #tpu.memory_space<vmem>>, vector<16x256xbf16>
    tpu.vector_store %arg6[%c64, %c0_28], %58 {strides = array<i32>} : memref<144x256xbf16, #tpu.memory_space<vmem>>, vector<16x256xbf16>,
    %c0_29 = arith.constant 0 : index
    %c0_30 = arith.constant 0 : index
    %c33 = arith.constant 33 : index
    %60 = vector.load %arg2[%c0_29, %c0_30, %c33] : memref<1x16x320xbf16, #tpu.memory_space<vmem>>, vector<1x16x256xbf16>
    %61 = vector.shape_cast %60 : vector<1x16x256xbf16> to vector<16x256xbf16>
    %cst_31 = arith.constant 0.000000e+00 : bf16
    %62 = vector.broadcast %cst_31 : bf16 to vector<16x256xbf16>
    %63 = arith.select %38, %61, %62 : vector<16x256xi1>, vector<16x256xbf16>
    %c80 = arith.constant 80 : index
    %c0_32 = arith.constant 0 : index
    %64 = vector.load %arg6[%c80, %c0_32] : memref<144x256xbf16, #tpu.memory_space<vmem>>, vector<16x256xbf16>
    tpu.vector_store %arg6[%c80, %c0_32], %63 {strides = array<i32>} : memref<144x256xbf16, #tpu.memory_space<vmem>>, vector<16x256xbf16>,
    %c0_33 = arith.constant 0 : index
    %c0_34 = arith.constant 0 : index
    %c47 = arith.constant 47 : index
    %65 = vector.load %arg2[%c0_33, %c0_34, %c47] : memref<1x16x320xbf16, #tpu.memory_space<vmem>>, vector<1x16x256xbf16>
    %66 = vector.shape_cast %65 : vector<1x16x256xbf16> to vector<16x256xbf16>
    %cst_35 = arith.constant 0.000000e+00 : bf16
    %67 = vector.broadcast %cst_35 : bf16 to vector<16x256xbf16>
    %68 = arith.select %27, %66, %67 : vector<16x256xi1>, vector<16x256xbf16>
    %c96 = arith.constant 96 : index
    %c0_36 = arith.constant 0 : index
    %69 = vector.load %arg6[%c96, %c0_36] : memref<144x256xbf16, #tpu.memory_space<vmem>>, vector<16x256xbf16>
    tpu.vector_store %arg6[%c96, %c0_36], %68 {strides = array<i32>} : memref<144x256xbf16, #tpu.memory_space<vmem>>, vector<16x256xbf16>,
    %c0_37 = arith.constant 0 : index
    %c0_38 = arith.constant 0 : index
    %c48_39 = arith.constant 48 : index
    %70 = vector.load %arg2[%c0_37, %c0_38, %c48_39] : memref<1x16x320xbf16, #tpu.memory_space<vmem>>, vector<1x16x256xbf16>
    %71 = vector.shape_cast %70 : vector<1x16x256xbf16> to vector<16x256xbf16>
    %c112 = arith.constant 112 : index
    %c0_40 = arith.constant 0 : index
    %72 = vector.load %arg6[%c112, %c0_40] : memref<144x256xbf16, #tpu.memory_space<vmem>>, vector<16x256xbf16>
    tpu.vector_store %arg6[%c112, %c0_40], %71 {strides = array<i32>} : memref<144x256xbf16, #tpu.memory_space<vmem>>, vector<16x256xbf16>,
    %c0_41 = arith.constant 0 : index
    %c0_42 = arith.constant 0 : index
    %c49 = arith.constant 49 : index
    %73 = vector.load %arg2[%c0_41, %c0_42, %c49] : memref<1x16x320xbf16, #tpu.memory_space<vmem>>, vector<1x16x256xbf16>
    %74 = vector.shape_cast %73 : vector<1x16x256xbf16> to vector<16x256xbf16>
    %cst_43 = arith.constant 0.000000e+00 : bf16
    %75 = vector.broadcast %cst_43 : bf16 to vector<16x256xbf16>
    %76 = arith.select %38, %74, %75 : vector<16x256xi1>, vector<16x256xbf16>
    %c128 = arith.constant 128 : index
    %c0_44 = arith.constant 0 : index
    %77 = vector.load %arg6[%c128, %c0_44] : memref<144x256xbf16, #tpu.memory_space<vmem>>, vector<16x256xbf16>
    tpu.vector_store %arg6[%c128, %c0_44], %76 {strides = array<i32>} : memref<144x256xbf16, #tpu.memory_space<vmem>>, vector<16x256xbf16>,
    %c0_45 = arith.constant 0 : index
    %c0_46 = arith.constant 0 : index
    %78 = vector.load %arg3[%c0_45, %c0_46] : memref<8x144xbf16, #tpu.memory_space<vmem>>, vector<8x144xbf16>
    %c0_47 = arith.constant 0 : index
    %c0_48 = arith.constant 0 : index
    %79 = vector.load %arg6[%c0_47, %c0_48] : memref<144x256xbf16, #tpu.memory_space<vmem>>, vector<144x256xbf16>
    %cst_49 = arith.constant dense<0.000000e+00> : vector<8x256xf32>
    %80 = tpu.matmul %78, %79, %cst_49 {dimension_numbers = #tpu.dot_dimension_numbers<[1], [0], [0], [1], [0, 0, 1, 1], [], []>} : vector<8x144xbf16>, vector<144x256xbf16>, vector<8x256xf32> -> vector<8x256xf32>
    %c0_50 = arith.constant 0 : index
    %c0_51 = arith.constant 0 : index
    %81 = vector.load %arg4[%c0_50, %c0_51] : memref<8x1xf32, #tpu.memory_space<vmem>>, vector<8x1xf32>
    %82 = vector.broadcast %81 : vector<8x1xf32> to vector<8x256xf32>
    %83 = arith.addf %80, %82 : vector<8x256xf32>
    %cst_52 = arith.constant 0.000000e+00 : f32
    %84 = vector.broadcast %cst_52 : f32 to vector<8x256xf32>
    %85 = arith.cmpf ogt, %83, %84 : vector<8x256xf32>
    %cst_53 = arith.constant 2.000000e-01 : f32
    %86 = vector.broadcast %cst_53 : f32 to vector<8x256xf32>
    %87 = arith.mulf %86, %83 : vector<8x256xf32>
    %88 = arith.select %85, %83, %87 : vector<8x256xi1>, vector<8x256xf32>
    %c0_54 = arith.constant 0 : index
    %c0_55 = arith.constant 0 : index
    %c0_56 = arith.constant 0 : index
    %89 = vector.load %arg5[%c0_54, %c0_55, %c0_56] : memref<1x8x256xf32, #tpu.memory_space<vmem>>, vector<1x8x256xf32>
    %90 = vector.shape_cast %89 : vector<1x8x256xf32> to vector<8x256xf32>
    %91 = vector.shape_cast %88 : vector<8x256xf32> to vector<1x8x256xf32>
    tpu.vector_store %arg5[%c0_54, %c0_55, %c0_56], %91 {strides = array<i32>} : memref<1x8x256xf32, #tpu.memory_space<vmem>>, vector<1x8x256xf32>,
    return
  }
  func.func @transform_0(%arg0: i32, %arg1: i32) -> (i32, i32, i32) {
    %c0_i32 = arith.constant 0 : i32
    %c0_i32_0 = arith.constant 0 : i32
    %c0_i32_1 = arith.constant 0 : i32
    return %arg0, %c0_i32, %c0_i32_0 : i32, i32, i32
  }
  func.func @transform_1(%arg0: i32, %arg1: i32) -> (i32, i32) {
    %c0_i32 = arith.constant 0 : i32
    %c0_i32_0 = arith.constant 0 : i32
    %c0_i32_1 = arith.constant 0 : i32
    return %c0_i32, %c0_i32_0 : i32, i32
  }
  func.func @transform_2(%arg0: i32, %arg1: i32) -> (i32, i32) {
    %c0_i32 = arith.constant 0 : i32
    %c0_i32_0 = arith.constant 0 : i32
    %c0_i32_1 = arith.constant 0 : i32
    return %c0_i32, %c0_i32_0 : i32, i32
  }
  func.func @transform_3(%arg0: i32, %arg1: i32) -> (i32, i32, i32) {
    %c0_i32 = arith.constant 0 : i32
    %c0_i32_0 = arith.constant 0 : i32
    return %arg0, %c0_i32, %arg1 : i32, i32, i32
  }
}

</mosaic_0001>

<llo_original>
// kernel: tpu_custom_call.1
$region0: #{tpu_custom_call.1}
  #allocation0 [shape = 'u32[]', space=smem, size = 0x4, offset = 0x4, fixed_abs, tag = 'smem constant byte address 0x4 - core index']
  #allocation1 [shape = 'u32[72,128]{1,0:T(1,128)}', space=vmem, size = 0x9000, scoped, tag = 'internal scratch']
  #allocation2 [shape = 'bf16[144,256]{1,0:T(8,128)(2,1)}', space=vmem, size = 0x12000, scoped, tag = 'scratch operand']
  %s0 = inlined_call_operand.hbm [shape: bf16[2,16,320], index: 0, kind: input, shape index: {}]
  %s1 = inlined_call_operand.vmem [shape: bf16[8,144], index: 1, kind: input, shape index: {}]
  %s2 = inlined_call_operand.vmem [shape: f32[8,1], index: 2, kind: input, shape index: {}]
  %s3 = inlined_call_operand.hbm [shape: f32[2,8,256], index: 3, kind: output, shape index: {}]
  %s4 = sld [smem:[#allocation0]]
  $region49: #{tpu_custom_call.1} parent=0
    _
  %s6 = ssub.s32 1, %s4
  %s7 = scalar_select 0, %s6, %s4
  $region1: #{tpu_custom_call.1} parent=0
    #allocation3 [shape = 'u8[24576]{0}', space=vmem, size = 0x6000, scoped, tag = 'input window, operand 0']
    #allocation4 [shape = 's32[2]{0}', space=sflag, size = 0x8, scoped, tag = 'scoped memory for tpu_custom_call.1']
    #allocation5 [shape = 's32[2]{0}', space=sflag, size = 0x8, scoped, tag = 'scoped memory for tpu_custom_call.1']
    #allocation6 [shape = 'u8[16384]{0}', space=vmem, size = 0x4000, scoped, tag = 'output window, operand 0']
    %8 = vsyncpa [#allocation4], 0
    %s9 = scalar_lea.sflag [#allocation4], 1
    %10 = vsyncpa %s9, 0
    %11 = vsyncpa [#allocation5], 0
    %s12 = scalar_lea.sflag [#allocation5], 1
    %13 = vsyncpa %s12, 0
    loop: start=0, step=1, limit=4
    $region2: #{tpu_custom_call.1} parent=1 // loop_pre_header
      _
    $region3: #{tpu_custom_call.1} parent=1 // loop_header
      %s15 = sphi 0, %s19
      %p16 = scmp.ge.s32.totalorder %s15, 4
      %s22 = sphi 0, %s34
      %s23 = sphi 0, %s30
      %s24 = sphi 0, %s22
      %s25 = sphi 0, %s23
      %s26 = sphi 0, %s24
      %s27 = sphi 0, %s25
      %s37 = sphi 0, %s39
      %s40 = sphi 0, %s37
      %s41 = sphi 0, %s40
      %s57 = sphi 0, %s41
      %s61 = sphi 0, %s61
      %s63 = sphi 0, %s61
      %s64 = sphi 0, %s63
      %s78 = sphi 0, %s64
      %s82 = sphi 0, %s82
      %s84 = sphi 0, %s82
      %s85 = sphi 0, %s84
      %s99 = sphi 0, %s85
      %s107 = sphi 0, %s109
      %s110 = sphi 0, %s107
      %s111 = sphi 0, %s110
      %s127 = sphi 0, %s111
    $region4: #{tpu_custom_call.1} parent=1 // loop_header_branch
      %18 = sbr.rel (%p16) target = $region8
    $region5: #{tpu_custom_call.1} parent=1 // loop_body
      %s20 = ssub.s32 %s15, 1
      %s21 = ssub.s32 %s15, 2
      %s28 = sadd.s32 1, %s23
      %p29 = scmp.ge.s32.totalorder %s28, 1
      %s30 = scalar_select %p29, 0, %s28
      %s31 = sadd.s32 1, %s22
      %s32 = scalar_select %p29, %s31, %s22
      %p33 = scmp.ge.s32.totalorder %s32, 2
      %s34 = scalar_select %p33, 0, %s32
      %s35 = ssub.s32 %s22, %s34
      %p36 = scmp.eq.s32.totalorder %s35, 0
      %s38 = sadd.s32 %s37, 1
      %s39 = scalar_select %p36, %s37, %s38
      %p42 = pneg %p36
      %p43 = scmp.eq.s32.totalorder %s15, 1
      %p44 = por %p42, %p43
      %p45 = scmp.ne.s32.totalorder %s37, %s40
      %p46 = scmp.eq.s32.totalorder %s15, 0
      %p47 = por %p45, %p46
      %p48 = scmp.ne.s32.totalorder %s37, %s40
      %p49 = scmp.eq.s32.totalorder %s20, 1
      %p50 = por %p48, %p49
      %p51 = scmp.ne.s32.totalorder %s40, %s41
      %p52 = scmp.eq.s32.totalorder %s20, 0
      %p53 = por %p51, %p52
      %p54 = scmp.ne.s32.totalorder %s40, %s41
      %p55 = scmp.eq.s32.totalorder %s21, 1
      %p56 = por %p54, %p55
      %p58 = scmp.ne.s32.totalorder %s41, %s57
      %p59 = scmp.eq.s32.totalorder %s21, 0
      %p60 = por %p58, %p59
      %s62 = sadd.s32 %s61, 1
      %p65 = scmp.eq.s32.totalorder %s15, 1
      %p66 = scmp.ne.s32.totalorder %s61, %s63
      %p67 = scmp.eq.s32.totalorder %s15, 0
      %p68 = por %p66, %p67
      %p69 = scmp.ne.s32.totalorder %s61, %s63
      %p70 = scmp.eq.s32.totalorder %s20, 1
      %p71 = por %p69, %p70
      %p72 = scmp.ne.s32.totalorder %s63, %s64
      %p73 = scmp.eq.s32.totalorder %s20, 0
      %p74 = por %p72, %p73
      %p75 = scmp.ne.s32.totalorder %s63, %s64
      %p76 = scmp.eq.s32.totalorder %s21, 1
      %p77 = por %p75, %p76
      %p79 = scmp.ne.s32.totalorder %s64, %s78
      %p80 = scmp.eq.s32.totalorder %s21, 0
      %p81 = por %p79, %p80
      %s83 = sadd.s32 %s82, 1
      %p86 = scmp.eq.s32.totalorder %s15, 1
      %p87 = scmp.ne.s32.totalorder %s82, %s84
      %p88 = scmp.eq.s32.totalorder %s15, 0
      %p89 = por %p87, %p88
      %p90 = scmp.ne.s32.totalorder %s82, %s84
      %p91 = scmp.eq.s32.totalorder %s20, 1
      %p92 = por %p90, %p91
      %p93 = scmp.ne.s32.totalorder %s84, %s85
      %p94 = scmp.eq.s32.totalorder %s20, 0
      %p95 = por %p93, %p94
      %p96 = scmp.ne.s32.totalorder %s84, %s85
      %p97 = scmp.eq.s32.totalorder %s21, 1
      %p98 = por %p96, %p97
      %p100 = scmp.ne.s32.totalorder %s85, %s99
      %p101 = scmp.eq.s32.totalorder %s21, 0
      %p102 = por %p100, %p101
      %s103 = ssub.s32 %s22, %s34
      %s104 = ssub.s32 %s23, %s30
      %s105 = sor.u32 %s103, %s104
      %p106 = scmp.eq.s32.totalorder %s105, 0
      %s108 = sadd.s32 %s107, 1
      %s109 = scalar_select %p106, %s107, %s108
      %p112 = pneg %p106
      %p113 = scmp.eq.s32.totalorder %s15, 1
      %p114 = por %p112, %p113
      %p115 = scmp.ne.s32.totalorder %s107, %s110
      %p116 = scmp.eq.s32.totalorder %s15, 0
      %p117 = por %p115, %p116
      %p118 = scmp.ne.s32.totalorder %s107, %s110
      %p119 = scmp.eq.s32.totalorder %s20, 1
      %p120 = por %p118, %p119
      %p121 = scmp.ne.s32.totalorder %s110, %s111
      %p122 = scmp.eq.s32.totalorder %s20, 0
      %p123 = por %p121, %p122
      %p124 = scmp.ne.s32.totalorder %s110, %s111
      %p125 = scmp.eq.s32.totalorder %s21, 1
      %p126 = por %p124, %p125
      %p128 = scmp.ne.s32.totalorder %s111, %s127
      %p129 = scmp.eq.s32.totalorder %s21, 0
      %p130 = por %p128, %p129
      %p131 = scmp.le.s32.totalorder 1, %s15
      %p132 = scmp.lt.s32.totalorder %s15, 3
      %p133 = pnand %p131, %p132
      %p134 = pneg %p133
      // Predicated region
      $region9: #{tpu_custom_call.1} parent=5 // pred_check
        _
      $region10: #{tpu_custom_call.1} parent=5 // pred_check_branch
        %136 = sbr.rel (%p133) target = $region12
      $region11: #{tpu_custom_call.1} parent=5 // pred_region
        %s137 = ssub.s32 %s15, 1
        // Predicated region
        $region13: #{tpu_custom_call.1} parent=11 // pred_check
          %p138 = pneg %p74
        $region14: #{tpu_custom_call.1} parent=11 // pred_check_branch
          %140 = sbr.rel (%p138) target = $region16
        $region15: #{tpu_custom_call.1} parent=11 // pred_region
          _
        $region16: #{tpu_custom_call.1} parent=11 // pred_fallthru
          _
        // Predicated region
        $region17: #{tpu_custom_call.1} parent=11 // pred_check
          %p141 = pneg %p95
        $region18: #{tpu_custom_call.1} parent=11 // pred_check_branch
          %143 = sbr.rel (%p141) target = $region20
        $region19: #{tpu_custom_call.1} parent=11 // pred_region
          _
        $region20: #{tpu_custom_call.1} parent=11 // pred_fallthru
          _
      $region12: #{tpu_custom_call.1} parent=5 // pred_fallthru
        _
      %p144 = scmp.lt.s32.totalorder %s15, 2
      // Predicated region
      $region21: #{tpu_custom_call.1} parent=5 // pred_check
        %p145 = pneg %p144
      $region22: #{tpu_custom_call.1} parent=5 // pred_check_branch
        %147 = sbr.rel (%p145) target = $region24
      $region23: #{tpu_custom_call.1} parent=5 // pred_region
        // Predicated region
        $region25: #{tpu_custom_call.1} parent=23 // pred_check
          %p148 = pneg %p47
        $region26: #{tpu_custom_call.1} parent=23 // pred_check_branch
          %150 = sbr.rel (%p148) target = $region28
        $region27: #{tpu_custom_call.1} parent=23 // pred_region
          %s151 = sand.u32 %s37, 1
          %s152 = scalar_lea.sflag [#allocation4], %s151
          %s153 = sand.u32 %s37, 1
          %s154 = smul.addr %s153, 24
          %s155 = scalar_lea.vmem [#allocation3], %s154
          %157 = vsyncadd %s152, 0
          %s158 = smul.addr %s22, 6
          %s159 = smul.addr %s158, 4
          %s160 = scalar_lea.hbm %s0, %s159
          %s161 = sshll.u32 %s160, 4
          %s162 = int_to_ptr.hbm [resolvable:$true] %s161
          %s163 = sshll.u32 %s155, 4
          %s164 = int_to_ptr.vmem [resolvable:$true] %s163
          %169 = dma.hbm_to_vmem [thread:$0]  %s162, 384, %s164, %s152, 192, 192, 12
        $region28: #{tpu_custom_call.1} parent=23 // pred_fallthru
          _
      $region24: #{tpu_custom_call.1} parent=5 // pred_fallthru
        _
      %p170 = scmp.le.s32.totalorder 1, %s15
      %p171 = scmp.lt.s32.totalorder %s15, 3
      %p172 = pnand %p170, %p171
      %p173 = pneg %p172
      // Predicated region
      $region29: #{tpu_custom_call.1} parent=5 // pred_check
        _
      $region30: #{tpu_custom_call.1} parent=5 // pred_check_branch
        %175 = sbr.rel (%p172) target = $region32
      $region31: #{tpu_custom_call.1} parent=5 // pred_region
        %s176 = ssub.s32 %s15, 1
        %s177 = sand.u32 %s40, 1
        %s178 = scalar_lea.sflag [#allocation4], %s177
        %s179 = sand.u32 %s40, 1
        %s180 = smul.addr %s179, 24
        %s181 = scalar_lea.vmem [#allocation3], %s180
        // Predicated region
        $region33: #{tpu_custom_call.1} parent=31 // pred_check
          %p182 = pneg %p53
        $region34: #{tpu_custom_call.1} parent=31 // pred_check_branch
          %184 = sbr.rel (%p182) target = $region36
        $region35: #{tpu_custom_call.1} parent=31 // pred_region
          %186 = dma.done %s178, 384
        $region36: #{tpu_custom_call.1} parent=31 // pred_fallthru
          _
        %s187 = sand.u32 %s40, 1
        %s188 = scalar_lea.sflag [#allocation4], %s187
        %s189 = sand.u32 %s40, 1
        %s190 = smul.addr %s189, 24
        %s191 = scalar_lea.vmem [#allocation3], %s190
        %p192 = pneg %p53
        %p193 = pneg %p50
        %p194 = pneg %p74
        %p195 = pneg %p71
        %p196 = pneg %p95
        %p197 = pneg %p92
        %p198 = pneg %p123
        %p199 = pneg %p120
        %s200 = sand.u32 %s110, 1
        %s201 = scalar_lea.sflag [#allocation5], %s200
        %s202 = sand.u32 %s110, 1
        %s203 = smul.addr %s202, 16
        %s204 = scalar_lea.vmem [#allocation6], %s203
        %s205 = smul.u32 2, %s25
        %v209 = vlaneseq
        %v210 = vand.u32 %v209, 127
        %v211 = vadd.s32 %v210, 128
        %vm212 = vcmp.lt.s32.totalorder %v210, 0
        %v213 = vsub.s32 0, %v210
        %v214 = vsel %vm212, %v213, %v210
        %v215 = vshrl.u32 %v214, 4
        %v216 = vand.u32 %v214, 15
        %v217 = vsub.s32 0, %v216
        %v218 = vsel %vm212, %v217, %v216
        %vm219 = vcmp.lt.s32.totalorder %v211, 0
        %v220 = vsub.s32 0, %v211
        %v221 = vsel %vm219, %v220, %v211
        %v222 = vshrl.u32 %v221, 4
        %v223 = vand.u32 %v221, 15
        %v224 = vsub.s32 0, %v223
        %v225 = vsel %vm219, %v224, %v223
        %vm226 = vcmp.ne.s32.totalorder %v218, 0
        %vm227 = vcmp.ne.s32.totalorder %v225, 0
        %vm228 = vcmp.lt.s32.totalorder %v218, 0
        %vm229 = vcmp.lt.s32.totalorder %v225, 0
        %vm230 = vmand %vm228, %vm226
        %vm231 = vmand %vm229, %vm227
        %v232 = vadd.s32 %v218, 16
        %v233 = vadd.s32 %v225, 16
        %v234 = vsel %vm230, %v232, %v218
        %v235 = vsel %vm231, %v233, %v225
        %v236 = vadd.s32 %v234, 4294967295
        %v237 = vadd.s32 %v235, 4294967295
        %vm238 = vcmp.ge.s32.totalorder %v236, 0
        %vm239 = vcmp.ge.s32.totalorder %v237, 0
        %vm240 = vcmp.lt.s32.totalorder %v236, 16
        %vm241 = vcmp.lt.s32.totalorder %v237, 16
        %vm242 = vmand %vm238, %vm240
        %vm243 = vmand %vm239, %vm241
        %v244 = vsel %vm242, 1, 0
        %v245 = vsel %vm243, 1, 0
        %vm246 = vcmp.eq.s32.totalorder %v244, 1
        %vm247 = vcmp.eq.s32.totalorder %v245, 1
        %v248 = vadd.s32 %v234, 1
        %v249 = vadd.s32 %v235, 1
        %vm250 = vcmp.ge.s32.totalorder %v248, 0
        %vm251 = vcmp.ge.s32.totalorder %v249, 0
        %vm252 = vcmp.lt.s32.totalorder %v248, 16
        %vm253 = vcmp.lt.s32.totalorder %v249, 16
        %vm254 = vmand %vm250, %vm252
        %vm255 = vmand %vm251, %vm253
        %v256 = vsel %vm254, 1, 0
        %v257 = vsel %vm255, 1, 0
        %vm258 = vcmp.eq.s32.totalorder %v256, 1
        %vm259 = vcmp.eq.s32.totalorder %v257, 1
        %v260 = vld [vmem:[%s181] sm:$0xff]
        %v261 = vld [vmem:[%s181 + $0x8] sm:$0xf]
        %v262 = vld [vmem:[%s181 + $0xc] sm:$0xff]
        %v263 = vld [vmem:[%s181 + $0x14] sm:$0xf]
        %vm264 = vmpackc.low %vm247, %vm246
        %v265 = vsel %vm264, 65537, 0
        %266 = vrot.lane.b32.xlu0 %v265, 15
        %v267 = vpop.permute.xlu0 %266
        %v268 = vrot.slane %v267, 4
        %vm269 = vcmask 121856
        %v270 = vsel %vm269, %v268, %v267
        %v271 = vunpack.c.l.b16 %v270
        %v272 = vunpack.c.h.b16 %v270
        %v273 = vunpack.c.l.b16 0
        %v274 = vunpack.c.h.b16 0
        %vm275 = vcmp.ne.s32.totalorder %v271, %v273
        %vm276 = vcmp.ne.s32.totalorder %v272, %v274
        %vm277 = vmpackc.low %vm276, %vm275
        %v278 = vunpack.c.l.b16 %v268
        %v279 = vunpack.c.h.b16 %v268
        %v280 = vunpack.c.l.b16 0
        %v281 = vunpack.c.h.b16 0
        %vm282 = vcmp.ne.s32.totalorder %v278, %v280
        %vm283 = vcmp.ne.s32.totalorder %v279, %v281
        %vm284 = vmpackc.low %vm283, %vm282
        %v285 = vsel %vm277, %v260, 0
        %v286 = vsel %vm284, %v261, 0
        %v287 = vsel %vm277, %v262, 0
        %v288 = vsel %vm284, %v263, 0
        %293 = vrot.lane.b32.xlu0 %v285, 113
        %v294 = vpop.permute.xlu0 %293
        %295 = vrot.lane.b32.xlu0 %v286, 113
        %v296 = vpop.permute.xlu0 %295
        %297 = vrot.lane.b32.xlu0 %v287, 113
        %v298 = vpop.permute.xlu0 %297
        %299 = vrot.lane.b32.xlu0 %v288, 113
        %v300 = vpop.permute.xlu0 %299
        %v301 = vrot.slane %v294, 4
        %v302 = vrot.slane %v296, 4
        %v303 = vrot.slane %v298, 4
        %v304 = vrot.slane %v300, 4
        %vm305 = vcmask 1043456
        %v306 = vsel %vm305, %v301, %v302
        %vm307 = vcmask 924672
        %v308 = vsel %vm307, %v294, %v306
        %v309 = vsel %vm305, %v303, %v304
        %v310 = vsel %vm307, %v298, %v309
        %313 = vst [vmem:[#allocation2] sm:$0xff] %v308
        %314 = vst [vmem:[#allocation2 + $0x8] sm:$0xff] %v310
        %v315 = vld [vmem:[%s181] sm:$0xff]
        %v316 = vld [vmem:[%s181 + $0x8] sm:$0xf]
        %v317 = vld [vmem:[%s181 + $0xc] sm:$0xff]
        %v318 = vld [vmem:[%s181 + $0x14] sm:$0xf]
        %323 = vrot.lane.b32.xlu0 %v315, 112
        %v324 = vpop.permute.xlu0 %323
        %325 = vrot.lane.b32.xlu0 %v316, 112
        %v326 = vpop.permute.xlu0 %325
        %327 = vrot.lane.b32.xlu0 %v317, 112
        %v328 = vpop.permute.xlu0 %327
        %329 = vrot.lane.b32.xlu0 %v318, 112
        %v330 = vpop.permute.xlu0 %329
        %v331 = vrot.slane %v324, 4
        %v332 = vrot.slane %v326, 4
        %v333 = vrot.slane %v328, 4
        %v334 = vrot.slane %v330, 4
        %v335 = vsel %vm305, %v331, %v332
        %vm336 = vcmask 916480
        %v337 = vsel %vm336, %v324, %v335
        %v338 = vsel %vm305, %v333, %v334
        %v339 = vsel %vm336, %v328, %v338
        %342 = vst [vmem:[#allocation2 + $0x10] sm:$0xff] %v337
        %343 = vst [vmem:[#allocation2 + $0x18] sm:$0xff] %v339
        %v344 = vld [vmem:[%s181] sm:$0xff]
        %v345 = vld [vmem:[%s181 + $0x8] sm:$0xf]
        %v346 = vld [vmem:[%s181 + $0xc] sm:$0xff]
        %v347 = vld [vmem:[%s181 + $0x14] sm:$0xf]
        %vm348 = vmpackc.low %vm259, %vm258
        %v349 = vsel %vm348, 65537, 0
        %350 = vrot.lane.b32.xlu0 %v349, 17
        %v351 = vpop.permute.xlu0 %350
        %v352 = vrot.slane %v351, 4
        %vm353 = vcmask 138240
        %v354 = vsel %vm353, %v352, %v351
        %v355 = vunpack.c.l.b16 %v354
        %v356 = vunpack.c.h.b16 %v354
        %v357 = vunpack.c.l.b16 0
        %v358 = vunpack.c.h.b16 0
        %vm359 = vcmp.ne.s32.totalorder %v355, %v357
        %vm360 = vcmp.ne.s32.totalorder %v356, %v358
        %vm361 = vmpackc.low %vm360, %vm359
        %v362 = vunpack.c.l.b16 %v352
        %v363 = vunpack.c.h.b16 %v352
        %v364 = vunpack.c.l.b16 0
        %v365 = vunpack.c.h.b16 0
        %vm366 = vcmp.ne.s32.totalorder %v362, %v364
        %vm367 = vcmp.ne.s32.totalorder %v363, %v365
        %vm368 = vmpackc.low %vm367, %vm366
        %v369 = vsel %vm361, %v344, 0
        %v370 = vsel %vm368, %v345, 0
        %v371 = vsel %vm361, %v346, 0
        %v372 = vsel %vm368, %v347, 0
        %377 = vrot.lane.b32.xlu0 %v369, 111
        %v378 = vpop.permute.xlu0 %377
        %379 = vrot.lane.b32.xlu0 %v370, 111
        %v380 = vpop.permute.xlu0 %379
        %381 = vrot.lane.b32.xlu0 %v371, 111
        %v382 = vpop.permute.xlu0 %381
        %383 = vrot.lane.b32.xlu0 %v372, 111
        %v384 = vpop.permute.xlu0 %383
        %v385 = vrot.slane %v378, 4
        %v386 = vrot.slane %v380, 4
        %v387 = vrot.slane %v382, 4
        %v388 = vrot.slane %v384, 4
        %v389 = vsel %vm305, %v385, %v386
        %vm390 = vcmask 908288
        %v391 = vsel %vm390, %v378, %v389
        %v392 = vsel %vm305, %v387, %v388
        %v393 = vsel %vm390, %v382, %v392
        %396 = vst [vmem:[#allocation2 + $0x20] sm:$0xff] %v391
        %397 = vst [vmem:[#allocation2 + $0x28] sm:$0xff] %v393
        %v398 = vld [vmem:[%s181] sm:$0xff]
        %v399 = vld [vmem:[%s181 + $0x8] sm:$0xf]
        %v400 = vld [vmem:[%s181 + $0xc] sm:$0xff]
        %v401 = vld [vmem:[%s181 + $0x14] sm:$0xf]
        %402 = vrot.lane.b32.xlu0 %v265, 31
        %v403 = vpop.permute.xlu0 %402
        %v404 = vrot.slane %v403, 4
        %vm405 = vcmask 252928
        %v406 = vsel %vm405, %v404, %v403
        %v407 = vunpack.c.l.b16 %v406
        %v408 = vunpack.c.h.b16 %v406
        %v409 = vunpack.c.l.b16 0
        %v410 = vunpack.c.h.b16 0
        %vm411 = vcmp.ne.s32.totalorder %v407, %v409
        %vm412 = vcmp.ne.s32.totalorder %v408, %v410
        %vm413 = vmpackc.low %vm412, %vm411
        %v414 = vunpack.c.l.b16 %v404
        %v415 = vunpack.c.h.b16 %v404
        %v416 = vunpack.c.l.b16 0
        %v417 = vunpack.c.h.b16 0
        %vm418 = vcmp.ne.s32.totalorder %v414, %v416
        %vm419 = vcmp.ne.s32.totalorder %v415, %v417
        %vm420 = vmpackc.low %vm419, %vm418
        %v421 = vsel %vm413, %v398, 0
        %v422 = vsel %vm420, %v399, 0
        %v423 = vsel %vm413, %v400, 0
        %v424 = vsel %vm420, %v401, 0
        %429 = vrot.lane.b32.xlu0 %v421, 97
        %v430 = vpop.permute.xlu0 %429
        %431 = vrot.lane.b32.xlu0 %v422, 97
        %v432 = vpop.permute.xlu0 %431
        %433 = vrot.lane.b32.xlu0 %v423, 97
        %v434 = vpop.permute.xlu0 %433
        %435 = vrot.lane.b32.xlu0 %v424, 97
        %v436 = vpop.permute.xlu0 %435
        %v437 = vrot.slane %v430, 4
        %v438 = vrot.slane %v432, 4
        %v439 = vrot.slane %v434, 4
        %v440 = vrot.slane %v436, 4
        %v441 = vsel %vm305, %v437, %v438
        %vm442 = vcmask 793600
        %v443 = vsel %vm442, %v430, %v441
        %v444 = vsel %vm305, %v439, %v440
        %v445 = vsel %vm442, %v434, %v444
        %448 = vst [vmem:[#allocation2 + $0x30] sm:$0xff] %v443
        %449 = vst [vmem:[#allocation2 + $0x38] sm:$0xff] %v445
        %v450 = vld [vmem:[%s181] sm:$0xff]
        %v451 = vld [vmem:[%s181 + $0x8] sm:$0xf]
        %v452 = vld [vmem:[%s181 + $0xc] sm:$0xff]
        %v453 = vld [vmem:[%s181 + $0x14] sm:$0xf]
        %458 = vrot.lane.b32.xlu0 %v450, 96
        %v459 = vpop.permute.xlu0 %458
        %460 = vrot.lane.b32.xlu0 %v451, 96
        %v461 = vpop.permute.xlu0 %460
        %462 = vrot.lane.b32.xlu0 %v452, 96
        %v463 = vpop.permute.xlu0 %462
        %464 = vrot.lane.b32.xlu0 %v453, 96
        %v465 = vpop.permute.xlu0 %464
        %v466 = vrot.slane %v459, 4
        %v467 = vrot.slane %v461, 4
        %v468 = vrot.slane %v463, 4
        %v469 = vrot.slane %v465, 4
        %v470 = vsel %vm305, %v466, %v467
        %vm471 = vcmask 785408
        %v472 = vsel %vm471, %v459, %v470
        %v473 = vsel %vm305, %v468, %v469
        %v474 = vsel %vm471, %v463, %v473
        %477 = vst [vmem:[#allocation2 + $0x40] sm:$0xff] %v472
        %478 = vst [vmem:[#allocation2 + $0x48] sm:$0xff] %v474
        %v479 = vld [vmem:[%s181] sm:$0xff]
        %v480 = vld [vmem:[%s181 + $0x8] sm:$0xf]
        %v481 = vld [vmem:[%s181 + $0xc] sm:$0xff]
        %v482 = vld [vmem:[%s181 + $0x14] sm:$0xf]
        %483 = vrot.lane.b32.xlu0 %v349, 33
        %v484 = vpop.permute.xlu0 %483
        %v485 = vrot.slane %v484, 4
        %vm486 = vcmask 269312
        %v487 = vsel %vm486, %v485, %v484
        %v488 = vunpack.c.l.b16 %v487
        %v489 = vunpack.c.h.b16 %v487
        %v490 = vunpack.c.l.b16 0
        %v491 = vunpack.c.h.b16 0
        %vm492 = vcmp.ne.s32.totalorder %v488, %v490
        %vm493 = vcmp.ne.s32.totalorder %v489, %v491
        %vm494 = vmpackc.low %vm493, %vm492
        %v495 = vunpack.c.l.b16 %v485
        %v496 = vunpack.c.h.b16 %v485
        %v497 = vunpack.c.l.b16 0
        %v498 = vunpack.c.h.b16 0
        %vm499 = vcmp.ne.s32.totalorder %v495, %v497
        %vm500 = vcmp.ne.s32.totalorder %v496, %v498
        %vm501 = vmpackc.low %vm500, %vm499
        %v502 = vsel %vm494, %v479, 0
        %v503 = vsel %vm501, %v480, 0
        %v504 = vsel %vm494, %v481, 0
        %v505 = vsel %vm501, %v482, 0
        %510 = vrot.lane.b32.xlu0 %v502, 95
        %v511 = vpop.permute.xlu0 %510
        %512 = vrot.lane.b32.xlu0 %v503, 95
        %v513 = vpop.permute.xlu0 %512
        %514 = vrot.lane.b32.xlu0 %v504, 95
        %v515 = vpop.permute.xlu0 %514
        %516 = vrot.lane.b32.xlu0 %v505, 95
        %v517 = vpop.permute.xlu0 %516
        %v518 = vrot.slane %v511, 4
        %v519 = vrot.slane %v513, 4
        %v520 = vrot.slane %v515, 4
        %v521 = vrot.slane %v517, 4
        %v522 = vsel %vm305, %v518, %v519
        %vm523 = vcmask 777216
        %v524 = vsel %vm523, %v511, %v522
        %v525 = vsel %vm305, %v520, %v521
        %v526 = vsel %vm523, %v515, %v525
        %529 = vst [vmem:[#allocation2 + $0x50] sm:$0xff] %v524
        %530 = vst [vmem:[#allocation2 + $0x58] sm:$0xff] %v526
        %v531 = vld [vmem:[%s181] sm:$0xff]
        %v532 = vld [vmem:[%s181 + $0x8] sm:$0xf]
        %v533 = vld [vmem:[%s181 + $0xc] sm:$0xff]
        %v534 = vld [vmem:[%s181 + $0x14] sm:$0xf]
        %535 = vrot.lane.b32.xlu0 %v265, 47
        %v536 = vpop.permute.xlu0 %535
        %v537 = vrot.slane %v536, 4
        %vm538 = vcmask 384000
        %v539 = vsel %vm538, %v537, %v536
        %v540 = vunpack.c.l.b16 %v539
        %v541 = vunpack.c.h.b16 %v539
        %v542 = vunpack.c.l.b16 0
        %v543 = vunpack.c.h.b16 0
        %vm544 = vcmp.ne.s32.totalorder %v540, %v542
        %vm545 = vcmp.ne.s32.totalorder %v541, %v543
        %vm546 = vmpackc.low %vm545, %vm544
        %v547 = vunpack.c.l.b16 %v537
        %v548 = vunpack.c.h.b16 %v537
        %v549 = vunpack.c.l.b16 0
        %v550 = vunpack.c.h.b16 0
        %vm551 = vcmp.ne.s32.totalorder %v547, %v549
        %vm552 = vcmp.ne.s32.totalorder %v548, %v550
        %vm553 = vmpackc.low %vm552, %vm551
        %v554 = vsel %vm546, %v531, 0
        %v555 = vsel %vm553, %v532, 0
        %v556 = vsel %vm546, %v533, 0
        %v557 = vsel %vm553, %v534, 0
        %562 = vrot.lane.b32.xlu0 %v554, 81
        %v563 = vpop.permute.xlu0 %562
        %564 = vrot.lane.b32.xlu0 %v555, 81
        %v565 = vpop.permute.xlu0 %564
        %566 = vrot.lane.b32.xlu0 %v556, 81
        %v567 = vpop.permute.xlu0 %566
        %568 = vrot.lane.b32.xlu0 %v557, 81
        %v569 = vpop.permute.xlu0 %568
        %v570 = vrot.slane %v563, 4
        %v571 = vrot.slane %v565, 4
        %v572 = vrot.slane %v567, 4
        %v573 = vrot.slane %v569, 4
        %v574 = vsel %vm305, %v570, %v571
        %vm575 = vcmask 662528
        %v576 = vsel %vm575, %v563, %v574
        %v577 = vsel %vm305, %v572, %v573
        %v578 = vsel %vm575, %v567, %v577
        %581 = vst [vmem:[#allocation2 + $0x60] sm:$0xff] %v576
        %582 = vst [vmem:[#allocation2 + $0x68] sm:$0xff] %v578
        %v583 = vld [vmem:[%s181] sm:$0xff]
        %v584 = vld [vmem:[%s181 + $0x8] sm:$0xf]
        %v585 = vld [vmem:[%s181 + $0xc] sm:$0xff]
        %v586 = vld [vmem:[%s181 + $0x14] sm:$0xf]
        %591 = vrot.lane.b32.xlu0 %v583, 80
        %v592 = vpop.permute.xlu0 %591
        %593 = vrot.lane.b32.xlu0 %v584, 80
        %v594 = vpop.permute.xlu0 %593
        %595 = vrot.lane.b32.xlu0 %v585, 80
        %v596 = vpop.permute.xlu0 %595
        %597 = vrot.lane.b32.xlu0 %v586, 80
        %v598 = vpop.permute.xlu0 %597
        %v599 = vrot.slane %v592, 4
        %v600 = vrot.slane %v594, 4
        %v601 = vrot.slane %v596, 4
        %v602 = vrot.slane %v598, 4
        %v603 = vsel %vm305, %v599, %v600
        %vm604 = vcmask 654336
        %v605 = vsel %vm604, %v592, %v603
        %v606 = vsel %vm305, %v601, %v602
        %v607 = vsel %vm604, %v596, %v606
        %610 = vst [vmem:[#allocation2 + $0x70] sm:$0xff] %v605
        %611 = vst [vmem:[#allocation2 + $0x78] sm:$0xff] %v607
        %v612 = vld [vmem:[%s181] sm:$0xff]
        %v613 = vld [vmem:[%s181 + $0x8] sm:$0xf]
        %v614 = vld [vmem:[%s181 + $0xc] sm:$0xff]
        %v615 = vld [vmem:[%s181 + $0x14] sm:$0xf]
        %616 = vrot.lane.b32.xlu0 %v349, 49
        %v617 = vpop.permute.xlu0 %616
        %v618 = vrot.slane %v617, 4
        %vm619 = vcmask 400384
        %v620 = vsel %vm619, %v618, %v617
        %v621 = vunpack.c.l.b16 %v620
        %v622 = vunpack.c.h.b16 %v620
        %v623 = vunpack.c.l.b16 0
        %v624 = vunpack.c.h.b16 0
        %vm625 = vcmp.ne.s32.totalorder %v621, %v623
        %vm626 = vcmp.ne.s32.totalorder %v622, %v624
        %vm627 = vmpackc.low %vm626, %vm625
        %v628 = vunpack.c.l.b16 %v618
        %v629 = vunpack.c.h.b16 %v618
        %v630 = vunpack.c.l.b16 0
        %v631 = vunpack.c.h.b16 0
        %vm632 = vcmp.ne.s32.totalorder %v628, %v630
        %vm633 = vcmp.ne.s32.totalorder %v629, %v631
        %vm634 = vmpackc.low %vm633, %vm632
        %v635 = vsel %vm627, %v612, 0
        %v636 = vsel %vm634, %v613, 0
        %v637 = vsel %vm627, %v614, 0
        %v638 = vsel %vm634, %v615, 0
        %643 = vrot.lane.b32.xlu0 %v635, 79
        %v644 = vpop.permute.xlu0 %643
        %645 = vrot.lane.b32.xlu0 %v636, 79
        %v646 = vpop.permute.xlu0 %645
        %647 = vrot.lane.b32.xlu0 %v637, 79
        %v648 = vpop.permute.xlu0 %647
        %649 = vrot.lane.b32.xlu0 %v638, 79
        %v650 = vpop.permute.xlu0 %649
        %v651 = vrot.slane %v644, 4
        %v652 = vrot.slane %v646, 4
        %v653 = vrot.slane %v648, 4
        %v654 = vrot.slane %v650, 4
        %v655 = vsel %vm305, %v651, %v652
        %vm656 = vcmask 646144
        %v657 = vsel %vm656, %v644, %v655
        %v658 = vsel %vm305, %v653, %v654
        %v659 = vsel %vm656, %v648, %v658
        %662 = vst [vmem:[#allocation2 + $0x80] sm:$0xff] %v657
        %663 = vst [vmem:[#allocation2 + $0x88] sm:$0xff] %v659
        %v664 = vld [vmem:[%s1] sm:$0xff]
        %v665 = vld [vmem:[#allocation2] sm:$0xff]
        %v666 = vld [vmem:[#allocation2 + $0x8] sm:$0xff]
        %v667 = vld [vmem:[#allocation2 + $0x10] sm:$0xff]
        %v668 = vld [vmem:[#allocation2 + $0x18] sm:$0xff]
        %v669 = vld [vmem:[#allocation2 + $0x20] sm:$0xff]
        %v670 = vld [vmem:[#allocation2 + $0x28] sm:$0xff]
        %v671 = vld [vmem:[#allocation2 + $0x30] sm:$0xff]
        %v672 = vld [vmem:[#allocation2 + $0x38] sm:$0xff]
        %v673 = vld [vmem:[#allocation2 + $0x40] sm:$0xff]
        %v674 = vld [vmem:[#allocation2 + $0x48] sm:$0xff]
        %v675 = vld [vmem:[#allocation2 + $0x50] sm:$0xff]
        %v676 = vld [vmem:[#allocation2 + $0x58] sm:$0xff]
        %v677 = vld [vmem:[#allocation2 + $0x60] sm:$0xff]
        %v678 = vld [vmem:[#allocation2 + $0x68] sm:$0xff]
        %v679 = vld [vmem:[#allocation2 + $0x70] sm:$0xff]
        %v680 = vld [vmem:[#allocation2 + $0x78] sm:$0xff]
        %v681 = vld [vmem:[#allocation2 + $0x80] sm:$0xff]
        %v682 = vld [vmem:[#allocation2 + $0x88] sm:$0xff]
        %v683 = vld [vmem:[%s2] sm:$0xff]
        %685 = vset.pattern.permute.xlu0 0
        %686 = vperm.xlu0 %685, %v683
        %v687 = vpop.permute.xlu0 %686
        %v690 = vunpack.c.l.b16 %v664
        %v691 = vunpack.c.h.b16 %v664
        %v692 = vpack.c.b16 %v690, %v690
        %v693 = vpack.c.b16 %v691, %v691
        %v713 = vunpack.c.l.b16 %v665
        %v714 = vunpack.c.h.b16 %v665
        %v715 = vunpack.c.l.b16 %v666
        %v716 = vunpack.c.h.b16 %v666
        %v717 = vunpack.c.l.b16 %v667
        %v718 = vunpack.c.h.b16 %v667
        %v719 = vunpack.c.l.b16 %v668
        %v720 = vunpack.c.h.b16 %v668
        %v721 = vunpack.c.l.b16 %v669
        %v722 = vunpack.c.h.b16 %v669
        %v723 = vunpack.c.l.b16 %v670
        %v724 = vunpack.c.h.b16 %v670
        %v725 = vunpack.c.l.b16 %v671
        %v726 = vunpack.c.h.b16 %v671
        %v727 = vunpack.c.l.b16 %v672
        %v728 = vunpack.c.h.b16 %v672
        %v729 = vunpack.c.l.b16 %v673
        %v730 = vunpack.c.h.b16 %v673
        %v731 = vunpack.c.l.b16 %v674
        %v732 = vunpack.c.h.b16 %v674
        %v733 = vunpack.c.l.b16 %v675
        %v734 = vunpack.c.h.b16 %v675
        %v735 = vunpack.c.l.b16 %v676
        %v736 = vunpack.c.h.b16 %v676
        %v737 = vunpack.c.l.b16 %v677
        %v738 = vunpack.c.h.b16 %v677
        %v739 = vunpack.c.l.b16 %v678
        %v740 = vunpack.c.h.b16 %v678
        %v741 = vunpack.c.l.b16 %v679
        %v742 = vunpack.c.h.b16 %v679
        %v743 = vunpack.c.l.b16 %v680
        %v744 = vunpack.c.h.b16 %v680
        %v745 = vunpack.c.l.b16 %v681
        %v746 = vunpack.c.h.b16 %v681
        %v747 = vunpack.c.l.b16 %v682
        %v748 = vunpack.c.h.b16 %v682
        %v749 = vpack.c.b16 %v715, %v713
        %v750 = vpack.c.b16 %v716, %v714
        %v751 = vpack.c.b16 %v719, %v717
        %v752 = vpack.c.b16 %v720, %v718
        %v753 = vpack.c.b16 %v723, %v721
        %v754 = vpack.c.b16 %v724, %v722
        %v755 = vpack.c.b16 %v727, %v725
        %v756 = vpack.c.b16 %v728, %v726
        %v757 = vpack.c.b16 %v731, %v729
        %v758 = vpack.c.b16 %v732, %v730
        %v759 = vpack.c.b16 %v735, %v733
        %v760 = vpack.c.b16 %v736, %v734
        %v761 = vpack.c.b16 %v739, %v737
        %v762 = vpack.c.b16 %v740, %v738
        %v763 = vpack.c.b16 %v743, %v741
        %v764 = vpack.c.b16 %v744, %v742
        %v765 = vpack.c.b16 %v747, %v745
        %v766 = vpack.c.b16 %v748, %v746
        %vm785 = vcmask 130048
        %v787 = vsel %vm785, %v693, 0
        %789 = vmatpush.bf16.msra.mxu0 %v763
        %790 = vmatpush.bf16.msra.mxu0 %v761
        %791 = vmatpush.bf16.msra.mxu0 %v759
        %792 = vmatpush.bf16.msra.mxu0 %v757
        %793 = vmatpush.bf16.msra.mxu0 %v755
        %794 = vmatpush.bf16.msra.mxu0 %v753
        %795 = vmatpush.bf16.msra.mxu0 %v751
        %796 = vmatpush.bf16.msra.mxu0 %v749
        %797 = vmatmul.bf16.gmra.mxu0 %v692
        %v798 = vpop.f32.mrf.mxu0
        %v799 = vadd.f32 %v687, %v798
        %v800 = vpop.f32.mrf.mxu0
        %801 = vdwg.mxu0
        %802 = vmatpush.bf16.msra.mxu0 0
        %803 = vmatpush.bf16.msra.mxu0 0
        %804 = vmatpush.bf16.msra.mxu0 0
        %805 = vmatpush.bf16.msra.mxu0 0
        %806 = vmatpush.bf16.msra.mxu0 0
        %807 = vmatpush.bf16.msra.mxu0 0
        %808 = vmatpush.bf16.msra.mxu0 0
        %809 = vmatpush.bf16.msra.mxu0 %v765
        %810 = vmatmul.bf16.gmra.mxu0 %v787
        %v811 = vpop.f32.mrf.mxu0
        %v812 = vadd.f32 %v799, %v811
        %v813 = vpop.f32.mrf.mxu0
        %814 = vdwg.mxu0
        %815 = vmatpush.bf16.msra.mxu0 %v764
        %816 = vmatpush.bf16.msra.mxu0 %v762
        %817 = vmatpush.bf16.msra.mxu0 %v760
        %818 = vmatpush.bf16.msra.mxu0 %v758
        %819 = vmatpush.bf16.msra.mxu0 %v756
        %820 = vmatpush.bf16.msra.mxu0 %v754
        %821 = vmatpush.bf16.msra.mxu0 %v752
        %822 = vmatpush.bf16.msra.mxu0 %v750
        %823 = vmatmul.bf16.gmra.mxu0 %v692
        %v824 = vpop.f32.mrf.mxu0
        %v825 = vadd.f32 %v687, %v824
        %v826 = vpop.f32.mrf.mxu0
        %827 = vdwg.mxu0
        %828 = vmatpush.bf16.msra.mxu0 0
        %829 = vmatpush.bf16.msra.mxu0 0
        %830 = vmatpush.bf16.msra.mxu0 0
        %831 = vmatpush.bf16.msra.mxu0 0
        %832 = vmatpush.bf16.msra.mxu0 0
        %833 = vmatpush.bf16.msra.mxu0 0
        %834 = vmatpush.bf16.msra.mxu0 0
        %835 = vmatpush.bf16.msra.mxu0 %v766
        %836 = vmatmul.bf16.gmra.mxu0 %v787
        %v837 = vpop.f32.mrf.mxu0
        %v838 = vadd.f32 %v825, %v837
        %v839 = vpop.f32.mrf.mxu0
        %840 = vdwg.mxu0
        %vm841 = vcmp.gt.f32.partialorder %v812, 0.0
        %vm842 = vcmp.gt.f32.partialorder %v838, 0.0
        %v843 = vmul.f32 %v812, 0.2
        %v844 = vmul.f32 %v838, 0.2
        %v845 = vsel %vm841, %v812, %v843
        %v846 = vsel %vm842, %v838, %v844
        %847 = vst [vmem:[%s204] sm:$0xff] %v845
        %848 = vst [vmem:[%s204 + $0x8] sm:$0xff] %v846
        %s849 = sand.u32 %s110, 1
        %s850 = scalar_lea.sflag [#allocation5], %s849
        %s851 = sand.u32 %s110, 1
        %s852 = smul.addr %s851, 16
        %s853 = scalar_lea.vmem [#allocation6], %s852
        // Predicated region
        $region37: #{tpu_custom_call.1} parent=31 // pred_check
          %p854 = pneg %p120
        $region38: #{tpu_custom_call.1} parent=31 // pred_check_branch
          %856 = sbr.rel (%p854) target = $region40
        $region39: #{tpu_custom_call.1} parent=31 // pred_region
          %s857 = smul.u32 2, %s25
          %859 = vsyncadd %s850, 0
          %s860 = smul.addr %s24, 2
          %s861 = sadd.s32 %s857, %s860
          %s862 = smul.addr %s861, 8
          %s863 = scalar_lea.hbm %s3, %s862
          %s865 = sshll.u32 %s853, 4
          %s866 = int_to_ptr.vmem [resolvable:$true] %s865
          %s867 = sshll.u32 %s863, 4
          %s868 = int_to_ptr.hbm [resolvable:$true] %s867
          %870 = dma.vmem_to_hbm [thread:$0]  %s866, 256, %s868, %s850
        $region40: #{tpu_custom_call.1} parent=31 // pred_fallthru
          _
      $region32: #{tpu_custom_call.1} parent=5 // pred_fallthru
        _
      %p871 = scmp.le.s32.totalorder 2, %s15
      // Predicated region
      $region41: #{tpu_custom_call.1} parent=5 // pred_check
        %p872 = pneg %p871
      $region42: #{tpu_custom_call.1} parent=5 // pred_check_branch
        %874 = sbr.rel (%p872) target = $region44
      $region43: #{tpu_custom_call.1} parent=5 // pred_region
        %s875 = ssub.s32 %s15, 2
        // Predicated region
        $region45: #{tpu_custom_call.1} parent=43 // pred_check
          %p876 = pneg %p126
        $region46: #{tpu_custom_call.1} parent=43 // pred_check_branch
          %878 = sbr.rel (%p876) target = $region48
        $region47: #{tpu_custom_call.1} parent=43 // pred_region
          %s879 = sand.u32 %s111, 1
          %s880 = scalar_lea.sflag [#allocation5], %s879
          %s881 = sand.u32 %s111, 1
          %s882 = smul.addr %s881, 16
          %s883 = scalar_lea.vmem [#allocation6], %s882
          %885 = dma.done %s880, 256
        $region48: #{tpu_custom_call.1} parent=43 // pred_fallthru
          _
      $region44: #{tpu_custom_call.1} parent=5 // pred_fallthru
        _
    $region6: #{tpu_custom_call.1} parent=1 // loop_footer
      %s19 = sadd.s32 1, %s15
    $region7: #{tpu_custom_call.1} parent=1 // loop_footer_branch
      %14 = sbr.rel target = $region3
    $region8: #{tpu_custom_call.1} parent=1 // loop_exit
      _
    %886 = vsyncpa [#allocation4], 1
    %s887 = scalar_lea.sflag [#allocation4], 1
    %888 = vsyncpa %s887, 1
    %889 = vsyncpa [#allocation5], 1
    %s890 = scalar_lea.sflag [#allocation5], 1
    %891 = vsyncpa %s890, 1

</llo_original>
